<compile_context>
chip_gen: v5e
topology: v5e:2x2
jax: 0.10.0
libtpu: 0.0.40
codegen_flags: <defaults>
</compile_context>

<pallas_src>
import math

import numpy as np

import jax
import jax.numpy as jnp
from jax.experimental import pallas as pl
from jax.experimental.pallas import tpu as pltpu

# ---- module hyper-parameters (small, consistent with Attention1) ----
N_HEADS = 4
CAT = 3
INPUT_DIM = 16
HIDDEN_DIM = 32
HEAD_DIM = HIDDEN_DIM // N_HEADS
NORM = 1.0 / math.sqrt(HIDDEN_DIM / N_HEADS)   # 1/sqrt(head_dim)
N_NODES = 21
N_PAD = 24                                      # nodes padded to a multiple of 8
BATCH = 2

CATD = CAT * INPUT_DIM                          # 48
H2 = 2 * HIDDEN_DIM                             # 64

# Packed parameter/constant slab row offsets (all multiples of 8; lane width 64).
_R_WW = 0         # (48, 32)  Q projection weight
_R_WKV = 48       # (16, 64)  fused [K | V] projection weight
_R_WFC = 64       # (64, 32)  fc weight; rows 32:64 = wfc (aligned with the V lanes)
_R_SELA = 128     # (32, 8)   head selector -> compat cols 0:4  (batch 0)
_R_SELB = 160     # (32, 8)   head selector -> compat cols 4:8  (batch 1)
_R_ST0 = 192      # (8, 64)   score -> V-lane expander (batch 0)
_R_ST1 = 200      # (8, 64)   score -> V-lane expander (batch 1)
SLAB_ROWS = 208


def pack_params(ww, wk, wv, wfc):
    """One-time parameter packing: four (in, out) weight matrices plus the
    constant head-selector tables go into a single (208, 64) f32 slab so the
    kernel sees exactly one weight DMA and zero in-kernel constant building."""
    sel = (np.arange(HIDDEN_DIM)[:, None] // HEAD_DIM
           == np.arange(N_HEADS)[None, :]).astype(np.float32)          # (32, 4)

    slab = np.zeros((SLAB_ROWS, H2), np.float32)
    slab[_R_WW:_R_WW + CATD, :HIDDEN_DIM] = np.asarray(ww, np.float32)
    slab[_R_WKV:_R_WKV + INPUT_DIM, :HIDDEN_DIM] = np.asarray(wk, np.float32)
    slab[_R_WKV:_R_WKV + INPUT_DIM, HIDDEN_DIM:] = np.asarray(wv, np.float32)
    slab[_R_WFC + HIDDEN_DIM:_R_WFC + H2, :HIDDEN_DIM] = np.asarray(wfc, np.float32)
    slab[_R_SELA:_R_SELA + HIDDEN_DIM, :N_HEADS] = sel
    slab[_R_SELB:_R_SELB + HIDDEN_DIM, N_HEADS:2 * N_HEADS] = sel
    slab[_R_ST0:_R_ST0 + N_HEADS, HIDDEN_DIM:] = sel.T
    slab[_R_ST1 + N_HEADS:_R_ST1 + 2 * N_HEADS, HIDDEN_DIM:] = sel.T
    return jnp.asarray(slab)


def attention1_kernel(st_ref, ctx_ref, mask_ref, w_ref, out_ref):
    # st_ref   : (B, CAT*INPUT_DIM)          query states, both batch elements
    # ctx_ref  : (B*N_PAD, INPUT_DIM)        node contexts, batch folded onto rows
    # mask_ref : (N_PAD, B*N_HEADS)          nonzero == masked (cols 0:4 b=0, 4:8 b=1)
    # w_ref    : (SLAB_ROWS, 2*HIDDEN_DIM)   packed weights + selector constants
    # out_ref  : (B, HIDDEN_DIM)

    # Static views into the packed slab.
    ww = w_ref[_R_WW:_R_WW + CATD, :HIDDEN_DIM]                       # (48, 32)
    wkv = w_ref[_R_WKV:_R_WKV + INPUT_DIM, :]                         # (16, 64)
    wfc = w_ref[_R_WFC:_R_WFC + H2, :HIDDEN_DIM]                      # (64, 32)
    sel_a = w_ref[_R_SELA:_R_SELA + HIDDEN_DIM, :2 * N_HEADS]         # (32, 8)
    sel_b = w_ref[_R_SELB:_R_SELB + HIDDEN_DIM, :2 * N_HEADS]         # (32, 8)
    selt0 = w_ref[_R_ST0:_R_ST0 + 2 * N_HEADS, :]                     # (8, 64)
    selt1 = w_ref[_R_ST1:_R_ST1 + 2 * N_HEADS, :]                     # (8, 64)

    # Q projection for the whole batch, pre-scaled once by 1/sqrt(head_dim).
    q = NORM * jnp.dot(st_ref[...], ww, preferred_element_type=jnp.float32)   # (2, 32)

    # Fused K|V projection for BOTH batch elements in a single MXU push.
    kv = jnp.dot(ctx_ref[...], wkv, preferred_element_type=jnp.float32)       # (48, 64)

    # Per-head compatibilities for both batch elements in one (24, 8) tile
    # (cols 0:4 = batch 0 heads, cols 4:8 = batch 1 heads).
    prod0 = q[0:1, :] * kv[0:N_PAD, 0:HIDDEN_DIM]                             # (24, 32)
    prod1 = q[1:2, :] * kv[N_PAD:2 * N_PAD, 0:HIDDEN_DIM]                     # (24, 32)
    compat = (jnp.dot(prod0, sel_a, preferred_element_type=jnp.float32)
              + jnp.dot(prod1, sel_b, preferred_element_type=jnp.float32))    # (24, 8)

    # Masked softmax over the node axis, both batch elements / all heads at once.
    # Matches masked_fill(-inf)+softmax; like the PyTorch module it needs >= 1
    # unmasked node per row (else NaN).  Padded node rows are always masked.
    u = jnp.where(mask_ref[...] != 0, -jnp.inf, compat)
    m = jnp.max(u, axis=0, keepdims=True)                                     # (1, 8)
    e = jnp.exp(u - m)
    scores = e / jnp.sum(e, axis=0, keepdims=True)                            # (24, 8)

    # Weighted sum over V per batch element.  The selector tables expand the 4
    # head scores directly onto the 32 V lanes (cols 32:64 of kv), so kv never
    # needs a lane-offset slice; head rows stay in vregs (no VMEM scratch).
    rows = []
    for b, selt in ((0, selt0), (1, selt1)):
        sl = jnp.dot(scores, selt, preferred_element_type=jnp.float32)        # (24, 64)
        p = sl * kv[b * N_PAD:(b + 1) * N_PAD, :]                             # (24, 64)
        rows.append(jnp.sum(p, axis=0, keepdims=True))                        # (1, 64)
    heads = jnp.concatenate(rows, axis=0)                                     # (2, 64)

    # fc(concat(heads)): cols 32:64 of `heads` hold the real head outputs and
    # line up with rows 32:64 of the zero-padded fc weight.
    out_ref[...] = jnp.dot(heads, wfc, preferred_element_type=jnp.float32)    # (2, 32)


def attention1(state_t, context, mask, wslab):
    """state_t: (B,1,48) f32; context: (B,21,16) f32; mask: (B,21) nonzero==masked;
    wslab: packed (208, 64) slab from pack_params().  Returns (B, 32) f32."""
    B, _, Dc = state_t.shape
    _, N, Din = context.shape
    assert (B, Dc, N, Din) == (BATCH, CATD, N_NODES, INPUT_DIM)

    st2d = state_t.reshape(B, Dc)

    # Layout glue: pad nodes to a sublane-aligned count (pad rows are masked so
    # they contribute exactly zero), fold batch onto rows, and replicate the
    # mask once per head / batch column of the in-kernel (24, 8) compat tile.
    pad = N_PAD - N
    ctx_flat = jnp.concatenate(
        [context, jnp.zeros((B, pad, Din), context.dtype)], axis=1
    ).reshape(B * N_PAD, Din)
    mask_pad = jnp.concatenate([mask, jnp.ones((B, pad), mask.dtype)], axis=1)
    mask8 = jnp.repeat(mask_pad.T, N_HEADS, axis=1)                   # (24, 8)

    return pl.pallas_call(
        attention1_kernel,
        out_shape=jax.ShapeDtypeStruct((B, HIDDEN_DIM), jnp.float32),
        grid_spec=pltpu.PrefetchScalarGridSpec(
            num_scalar_prefetch=0,
            grid=(1,),                 # whole (tiny) problem in one invocation
            in_specs=[
                pl.BlockSpec((B, Dc), lambda i: (0, 0)),
                pl.BlockSpec((B * N_PAD, Din), lambda i: (0, 0)),
                pl.BlockSpec((N_PAD, B * N_HEADS), lambda i: (0, 0)),
                pl.BlockSpec((SLAB_ROWS, H2), lambda i: (0, 0)),
            ],
            out_specs=pl.BlockSpec((B, HIDDEN_DIM), lambda i: (0, 0)),
        ),
        # TODO(synk): if many VRP instances are batched per call, add a leading
        # "parallel" batch grid axis so v7x's second TensorCore is used.
        compiler_params=pltpu.CompilerParams(dimension_semantics=("arbitrary",)),
    )(st2d, ctx_flat, mask8, wslab)


def attention1_ref(state_t, context, mask, ww, wk, wv, wfc):
    """Pure-JAX reference mirroring the PyTorch forward exactly."""
    B, _, Dc = state_t.shape
    _, N, Din = context.shape
    Q = (state_t.reshape(B, Dc) @ ww).reshape(B, 1, N_HEADS, HEAD_DIM).transpose(0, 2, 1, 3)
    K = (context @ wk).reshape(B, N, N_HEADS, HEAD_DIM).transpose(0, 2, 1, 3)
    V = (context @ wv).reshape(B, N, N_HEADS, HEAD_DIM).transpose(0, 2, 1, 3)
    compat = NORM * jnp.einsum('bhqd,bhkd->bhqk', Q, K)[:, :, 0, :]   # (B, heads, N)
    u = jnp.where(mask[:, None, :] != 0, -jnp.inf, compat)
    scores = jax.nn.softmax(u, axis=-1)
    out = jnp.einsum('bhn,bhnd->bhd', scores, V).reshape(B, HIDDEN_DIM)
    return out @ wfc


if __name__ == "__main__":
    key = jax.random.PRNGKey(0)
    ks = jax.random.split(key, 8)

    # Deterministic weight init (PyTorch nn.Linear stores (out, in); transpose
    # to the (in, out) layout used by the kernel).
    w_pt = 0.1 * jax.random.normal(ks[0], (HIDDEN_DIM, INPUT_DIM * CAT), jnp.float32)
    k_pt = 0.1 * jax.random.normal(ks[1], (HIDDEN_DIM, INPUT_DIM), jnp.float32)
    v_pt = 0.1 * jax.random.normal(ks[2], (HIDDEN_DIM, INPUT_DIM), jnp.float32)
    fc_pt = 0.1 * jax.random.normal(ks[3], (HIDDEN_DIM, HIDDEN_DIM), jnp.float32)
    ww, wk, wv, wfc = w_pt.T, k_pt.T, v_pt.T, fc_pt.T

    # One-time parameter packing (setup time, not per call).
    wslab = pack_params(ww, wk, wv, wfc)

    # Inputs
    state_t = jax.random.normal(ks[4], (BATCH, 1, INPUT_DIM * CAT), jnp.float32)
    context = jax.random.normal(ks[5], (BATCH, N_NODES, INPUT_DIM), jnp.float32)
    mask = jax.random.bernoulli(ks[6], 0.3, (BATCH, N_NODES)).astype(jnp.float32)
    mask = mask.at[:, 0].set(0.0)   # ensure at least one unmasked node per row

    out = attention1(state_t, context, mask, wslab)
    out = jax.block_until_ready(out)

    ref = attention1_ref(state_t, context, mask, ww, wk, wv, wfc)
    assert out.shape == (BATCH, HIDDEN_DIM)
    assert jnp.allclose(out, ref, atol=1e-3, rtol=1e-3), "mismatch vs reference"

    print("KERNEL_OK")
</pallas_src>

<mosaic_0001>
module attributes {stable_mosaic.version = 11 : i64} {
  func.func @attention1_kernel(%arg0: i32, %arg1: memref<2x48xf32, #tpu.memory_space<vmem>>, %arg2: memref<48x16xf32, #tpu.memory_space<vmem>>, %arg3: memref<24x8xf32, #tpu.memory_space<vmem>>, %arg4: memref<208x64xf32, #tpu.memory_space<vmem>>, %arg5: memref<2x32xf32, #tpu.memory_space<vmem>>) attributes {dimension_semantics = [#tpu.dimension_semantics<arbitrary>], iteration_bounds = array<i64: 1>, scalar_prefetch = 0 : i64, scratch_operands = 0 : i64, tpu.core_type = #tpu.core_type<tc>, window_params = [{pipeline_mode = #tpu.pipeline_mode<synchronous>, transform_indices = @transform_0, window_bounds = array<i64: 2, 48>}, {pipeline_mode = #tpu.pipeline_mode<synchronous>, transform_indices = @transform_1, window_bounds = array<i64: 48, 16>}, {pipeline_mode = #tpu.pipeline_mode<synchronous>, transform_indices = @transform_2, window_bounds = array<i64: 24, 8>}, {pipeline_mode = #tpu.pipeline_mode<synchronous>, transform_indices = @transform_3, window_bounds = array<i64: 208, 64>}, {pipeline_mode = #tpu.pipeline_mode<synchronous>, transform_indices = @transform_4, window_bounds = array<i64: 2, 32>}]} {
    %c0 = arith.constant 0 : index
    %c0_0 = arith.constant 0 : index
    %0 = vector.load %arg4[%c0, %c0_0] : memref<208x64xf32, #tpu.memory_space<vmem>>, vector<48x32xf32>
    %c48 = arith.constant 48 : index
    %c0_1 = arith.constant 0 : index
    %1 = vector.load %arg4[%c48, %c0_1] : memref<208x64xf32, #tpu.memory_space<vmem>>, vector<16x64xf32>
    %c64 = arith.constant 64 : index
    %c0_2 = arith.constant 0 : index
    %2 = vector.load %arg4[%c64, %c0_2] : memref<208x64xf32, #tpu.memory_space<vmem>>, vector<64x32xf32>
    %c128 = arith.constant 128 : index
    %c0_3 = arith.constant 0 : index
    %3 = vector.load %arg4[%c128, %c0_3] : memref<208x64xf32, #tpu.memory_space<vmem>>, vector<32x8xf32>
    %c160 = arith.constant 160 : index
    %c0_4 = arith.constant 0 : index
    %4 = vector.load %arg4[%c160, %c0_4] : memref<208x64xf32, #tpu.memory_space<vmem>>, vector<32x8xf32>
    %c192 = arith.constant 192 : index
    %c0_5 = arith.constant 0 : index
    %5 = vector.load %arg4[%c192, %c0_5] : memref<208x64xf32, #tpu.memory_space<vmem>>, vector<8x64xf32>
    %c200 = arith.constant 200 : index
    %c0_6 = arith.constant 0 : index
    %6 = vector.load %arg4[%c200, %c0_6] : memref<208x64xf32, #tpu.memory_space<vmem>>, vector<8x64xf32>
    %c0_7 = arith.constant 0 : index
    %c0_8 = arith.constant 0 : index
    %7 = vector.load %arg1[%c0_7, %c0_8] : memref<2x48xf32, #tpu.memory_space<vmem>>, vector<2x48xf32>
    %cst = arith.constant dense<0.000000e+00> : vector<2x32xf32>
    %8 = tpu.matmul %7, %0, %cst {dimension_numbers = #tpu.dot_dimension_numbers<[1], [0], [0], [1], [0, 0, 1, 1], [], []>} : vector<2x48xf32>, vector<48x32xf32>, vector<2x32xf32> -> vector<2x32xf32>
    %cst_9 = arith.constant 0.353553385 : f32
    %9 = vector.broadcast %cst_9 : f32 to vector<2x32xf32>
    %10 = arith.mulf %9, %8 : vector<2x32xf32>
    %c0_10 = arith.constant 0 : index
    %c0_11 = arith.constant 0 : index
    %11 = vector.load %arg2[%c0_10, %c0_11] : memref<48x16xf32, #tpu.memory_space<vmem>>, vector<48x16xf32>
    %cst_12 = arith.constant dense<0.000000e+00> : vector<48x64xf32>
    %12 = tpu.matmul %11, %1, %cst_12 {dimension_numbers = #tpu.dot_dimension_numbers<[1], [0], [0], [1], [0, 0, 1, 1], [], []>} : vector<48x16xf32>, vector<16x64xf32>, vector<48x64xf32> -> vector<48x64xf32>
    %13 = vector.extract_strided_slice %10 {offsets = [0, 0], sizes = [1, 32], strides = [1, 1]} : vector<2x32xf32> to vector<1x32xf32>
    %14 = vector.extract_strided_slice %12 {offsets = [0, 0], sizes = [24, 32], strides = [1, 1]} : vector<48x64xf32> to vector<24x32xf32>
    %15 = vector.broadcast %13 : vector<1x32xf32> to vector<24x32xf32>
    %16 = arith.mulf %15, %14 : vector<24x32xf32>
    %17 = vector.extract_strided_slice %10 {offsets = [1, 0], sizes = [1, 32], strides = [1, 1]} : vector<2x32xf32> to vector<1x32xf32>
    %18 = vector.extract_strided_slice %12 {offsets = [24, 0], sizes = [24, 32], strides = [1, 1]} : vector<48x64xf32> to vector<24x32xf32>
    %19 = vector.broadcast %17 : vector<1x32xf32> to vector<24x32xf32>
    %20 = arith.mulf %19, %18 : vector<24x32xf32>
    %cst_13 = arith.constant dense<0.000000e+00> : vector<24x8xf32>
    %21 = tpu.matmul %16, %3, %cst_13 {dimension_numbers = #tpu.dot_dimension_numbers<[1], [0], [0], [1], [0, 0, 1, 1], [], []>} : vector<24x32xf32>, vector<32x8xf32>, vector<24x8xf32> -> vector<24x8xf32>
    %cst_14 = arith.constant dense<0.000000e+00> : vector<24x8xf32>
    %22 = tpu.matmul %20, %4, %cst_14 {dimension_numbers = #tpu.dot_dimension_numbers<[1], [0], [0], [1], [0, 0, 1, 1], [], []>} : vector<24x32xf32>, vector<32x8xf32>, vector<24x8xf32> -> vector<24x8xf32>
    %23 = arith.addf %21, %22 : vector<24x8xf32>
    %c0_15 = arith.constant 0 : index
    %c0_16 = arith.constant 0 : index
    %24 = vector.load %arg3[%c0_15, %c0_16] : memref<24x8xf32, #tpu.memory_space<vmem>>, vector<24x8xf32>
    %cst_17 = arith.constant 0.000000e+00 : f32
    %25 = vector.broadcast %cst_17 : f32 to vector<24x8xf32>
    %26 = arith.cmpf one, %24, %25 : vector<24x8xf32>
    %cst_18 = arith.constant 0xFF800000 : f32
    %27 = vector.broadcast %cst_18 : f32 to vector<24x8xf32>
    %28 = arith.select %26, %27, %23 : vector<24x8xi1>, vector<24x8xf32>
    %cst_19 = arith.constant dense<0xFF800000> : vector<8xf32>
    %29 = vector.multi_reduction <maximumf>, %28, %cst_19 [0] : vector<24x8xf32> to vector<8xf32>
    %30 = vector.shape_cast %29 : vector<8xf32> to vector<1x8xf32>
    %31 = vector.broadcast %30 : vector<1x8xf32> to vector<24x8xf32>
    %32 = arith.subf %28, %31 : vector<24x8xf32>
    %33 = math.exp %32 : vector<24x8xf32>
    %cst_20 = arith.constant dense<0.000000e+00> : vector<8xf32>
    %34 = vector.multi_reduction <add>, %33, %cst_20 [0] : vector<24x8xf32> to vector<8xf32>
    %35 = vector.shape_cast %34 : vector<8xf32> to vector<1x8xf32>
    %36 = vector.broadcast %35 : vector<1x8xf32> to vector<24x8xf32>
    %37 = arith.divf %33, %36 : vector<24x8xf32>
    %cst_21 = arith.constant dense<0.000000e+00> : vector<24x64xf32>
    %38 = tpu.matmul %37, %5, %cst_21 {dimension_numbers = #tpu.dot_dimension_numbers<[1], [0], [0], [1], [0, 0, 1, 1], [], []>} : vector<24x8xf32>, vector<8x64xf32>, vector<24x64xf32> -> vector<24x64xf32>
    %39 = vector.extract_strided_slice %12 {offsets = [0, 0], sizes = [24, 64], strides = [1, 1]} : vector<48x64xf32> to vector<24x64xf32>
    %40 = arith.mulf %38, %39 : vector<24x64xf32>
    %cst_22 = arith.constant dense<0.000000e+00> : vector<64xf32>
    %41 = vector.multi_reduction <add>, %40, %cst_22 [0] : vector<24x64xf32> to vector<64xf32>
    %42 = vector.shape_cast %41 : vector<64xf32> to vector<1x64xf32>
    %cst_23 = arith.constant dense<0.000000e+00> : vector<24x64xf32>
    %43 = tpu.matmul %37, %6, %cst_23 {dimension_numbers = #tpu.dot_dimension_numbers<[1], [0], [0], [1], [0, 0, 1, 1], [], []>} : vector<24x8xf32>, vector<8x64xf32>, vector<24x64xf32> -> vector<24x64xf32>
    %44 = vector.extract_strided_slice %12 {offsets = [24, 0], sizes = [24, 64], strides = [1, 1]} : vector<48x64xf32> to vector<24x64xf32>
    %45 = arith.mulf %43, %44 : vector<24x64xf32>
    %cst_24 = arith.constant dense<0.000000e+00> : vector<64xf32>
    %46 = vector.multi_reduction <add>, %45, %cst_24 [0] : vector<24x64xf32> to vector<64xf32>
    %47 = vector.shape_cast %46 : vector<64xf32> to vector<1x64xf32>
    %48 = tpu.concatenate %42, %47 in 0 : vector<1x64xf32>, vector<1x64xf32> -> vector<2x64xf32>
    %cst_25 = arith.constant dense<0.000000e+00> : vector<2x32xf32>
    %49 = tpu.matmul %48, %2, %cst_25 {dimension_numbers = #tpu.dot_dimension_numbers<[1], [0], [0], [1], [0, 0, 1, 1], [], []>} : vector<2x64xf32>, vector<64x32xf32>, vector<2x32xf32> -> vector<2x32xf32>
    %c0_26 = arith.constant 0 : index
    %c0_27 = arith.constant 0 : index
    %50 = vector.load %arg5[%c0_26, %c0_27] : memref<2x32xf32, #tpu.memory_space<vmem>>, vector<2x32xf32>
    tpu.vector_store %arg5[%c0_26, %c0_27], %49 {strides = array<i32>} : memref<2x32xf32, #tpu.memory_space<vmem>>, vector<2x32xf32>,
    return
  }
  func.func @transform_0(%arg0: i32) -> (i32, i32) {
    %c0_i32 = arith.constant 0 : i32
    %c0_i32_0 = arith.constant 0 : i32
    %c0_i32_1 = arith.constant 0 : i32
    return %c0_i32, %c0_i32_0 : i32, i32
  }
  func.func @transform_1(%arg0: i32) -> (i32, i32) {
    %c0_i32 = arith.constant 0 : i32
    %c0_i32_0 = arith.constant 0 : i32
    %c0_i32_1 = arith.constant 0 : i32
    return %c0_i32, %c0_i32_0 : i32, i32
  }
  func.func @transform_2(%arg0: i32) -> (i32, i32) {
    %c0_i32 = arith.constant 0 : i32
    %c0_i32_0 = arith.constant 0 : i32
    %c0_i32_1 = arith.constant 0 : i32
    return %c0_i32, %c0_i32_0 : i32, i32
  }
  func.func @transform_3(%arg0: i32) -> (i32, i32) {
    %c0_i32 = arith.constant 0 : i32
    %c0_i32_0 = arith.constant 0 : i32
    %c0_i32_1 = arith.constant 0 : i32
    return %c0_i32, %c0_i32_0 : i32, i32
  }
  func.func @transform_4(%arg0: i32) -> (i32, i32) {
    %c0_i32 = arith.constant 0 : i32
    %c0_i32_0 = arith.constant 0 : i32
    %c0_i32_1 = arith.constant 0 : i32
    return %c0_i32, %c0_i32_0 : i32, i32
  }
}

</mosaic_0001>

<llo_original>
// kernel: tpu_custom_call.1
$region0: #{tpu_custom_call.1}
  #allocation0 [shape = 'u32[]', space=smem, size = 0x4, offset = 0x4, fixed_abs, tag = 'smem constant byte address 0x4 - core index']
  #allocation1 [shape = 'u32[72,128]{1,0:T(1,128)}', space=vmem, size = 0x9000, scoped, tag = 'internal scratch']
  %s0 = inlined_call_operand.vmem [shape: f32[2,48], index: 0, kind: input, shape index: {}]
  %s1 = inlined_call_operand.vmem [shape: f32[48,16], index: 1, kind: input, shape index: {}]
  %s2 = inlined_call_operand.vmem [shape: f32[24,8], index: 2, kind: input, shape index: {}]
  %s3 = inlined_call_operand.vmem [shape: f32[208,64], index: 3, kind: input, shape index: {}]
  %s4 = inlined_call_operand.hbm [shape: f32[2,32], index: 4, kind: output, shape index: {}]
  %s5 = sld [smem:[#allocation0]]
  $region26: #{tpu_custom_call.1} parent=0
    _
  %s7 = ssub.s32 1, %s5
  %s8 = scalar_select 0, %s7, %s5
  $region1: #{tpu_custom_call.1} parent=0
    #allocation2 [shape = 'u8[1024]{0}', space=vmem, size = 0x400, scoped, tag = 'output window, operand 0, single buffered']
    #allocation3 [shape = 's32[1]{0}', space=sflag, size = 0x4, scoped, tag = 'scoped memory for tpu_custom_call.1']
    %9 = vsyncpa [#allocation3], 0
    // Predicated region
    $region2: #{tpu_custom_call.1} parent=1 // pred_check
      _
    $region3: #{tpu_custom_call.1} parent=1 // pred_check_branch
      %11 = sbr.rel (0) target = $region5
    $region4: #{tpu_custom_call.1} parent=1 // pred_region
      _
    $region5: #{tpu_custom_call.1} parent=1 // pred_fallthru
      _
    // Predicated region
    $region6: #{tpu_custom_call.1} parent=1 // pred_check
      _
    $region7: #{tpu_custom_call.1} parent=1 // pred_check_branch
      %13 = sbr.rel (0) target = $region9
    $region8: #{tpu_custom_call.1} parent=1 // pred_region
      _
    $region9: #{tpu_custom_call.1} parent=1 // pred_fallthru
      _
    // Predicated region
    $region10: #{tpu_custom_call.1} parent=1 // pred_check
      _
    $region11: #{tpu_custom_call.1} parent=1 // pred_check_branch
      %15 = sbr.rel (0) target = $region13
    $region12: #{tpu_custom_call.1} parent=1 // pred_region
      _
    $region13: #{tpu_custom_call.1} parent=1 // pred_fallthru
      _
    // Predicated region
    $region14: #{tpu_custom_call.1} parent=1 // pred_check
      _
    $region15: #{tpu_custom_call.1} parent=1 // pred_check_branch
      %17 = sbr.rel (0) target = $region17
    $region16: #{tpu_custom_call.1} parent=1 // pred_region
      _
    $region17: #{tpu_custom_call.1} parent=1 // pred_fallthru
      _
    %v18 = vld [vmem:[%s3] sm:$0xff]
    %v19 = vld [vmem:[%s3 + $0x8] sm:$0xff]
    %v20 = vld [vmem:[%s3 + $0x10] sm:$0xff]
    %v21 = vld [vmem:[%s3 + $0x18] sm:$0xff]
    %v22 = vld [vmem:[%s3 + $0x20] sm:$0xff]
    %v23 = vld [vmem:[%s3 + $0x28] sm:$0xff]
    %v24 = vld [vmem:[%s3 + $0x30] sm:$0xff]
    %v25 = vld [vmem:[%s3 + $0x38] sm:$0xff]
    %v26 = vld [vmem:[%s3 + $0x40] sm:$0xff]
    %v27 = vld [vmem:[%s3 + $0x48] sm:$0xff]
    %v28 = vld [vmem:[%s3 + $0x50] sm:$0xff]
    %v29 = vld [vmem:[%s3 + $0x58] sm:$0xff]
    %v30 = vld [vmem:[%s3 + $0x60] sm:$0xff]
    %v31 = vld [vmem:[%s3 + $0x68] sm:$0xff]
    %v32 = vld [vmem:[%s3 + $0x70] sm:$0xff]
    %v33 = vld [vmem:[%s3 + $0x78] sm:$0xff]
    %v34 = vld [vmem:[%s3 + $0x80] sm:$0xff]
    %v35 = vld [vmem:[%s3 + $0x88] sm:$0xff]
    %v36 = vld [vmem:[%s3 + $0x90] sm:$0xff]
    %v37 = vld [vmem:[%s3 + $0x98] sm:$0xff]
    %v38 = vld [vmem:[%s3 + $0xa0] sm:$0xff]
    %v39 = vld [vmem:[%s3 + $0xa8] sm:$0xff]
    %v40 = vld [vmem:[%s3 + $0xb0] sm:$0xff]
    %v41 = vld [vmem:[%s3 + $0xb8] sm:$0xff]
    %v42 = vld [vmem:[%s3 + $0xc0] sm:$0xff]
    %v43 = vld [vmem:[%s3 + $0xc8] sm:$0xff]
    %v44 = vld [vmem:[%s0] sm:$0x3]
    %vm45 = vcmask 392192
    %v47 = vsel %vm45, %v44, 0
    %49 = vmatpush.msra.mxu0 0.0
    %50 = vmatpush.msra.mxu0 0.0
    %51 = vmatpush.msra.mxu0 0.0
    %52 = vmatpush.msra.mxu0 0.0
    %53 = vmatpush.msra.mxu0 0.0
    %54 = vmatpush.msra.mxu0 0.0
    %55 = vmatpush.msra.mxu0 0.0
    %56 = vmatpush.msra.mxu0 0.0
    %57 = vmatpush.msra.mxu0 0.0
    %58 = vmatpush.msra.mxu0 0.0
    %59 = vmatpush.msra.mxu0 %v23
    %60 = vmatpush.msra.mxu0 %v22
    %61 = vmatpush.msra.mxu0 %v21
    %62 = vmatpush.msra.mxu0 %v20
    %63 = vmatpush.msra.mxu0 %v19
    %64 = vmatpush.msra.mxu0 %v18
    %65 = vmatmul.f32.gmra.mxu0 %v47
    %v66 = vpop.f32.mrf.mxu0
    %v67 = vadd.f32 0.0, %v66
    %68 = vdwg.mxu0
    %v69 = vmul.f32 %v67, 0.35355338
    %v70 = vld [vmem:[%s1] sm:$0xff]
    %v71 = vld [vmem:[%s1 + $0x8] sm:$0xff]
    %v72 = vld [vmem:[%s1 + $0x10] sm:$0xff]
    %v73 = vld [vmem:[%s1 + $0x18] sm:$0xff]
    %v74 = vld [vmem:[%s1 + $0x20] sm:$0xff]
    %v75 = vld [vmem:[%s1 + $0x28] sm:$0xff]
    %vm76 = vcmask 130048
    %v78 = vsel %vm76, %v70, 0
    %v81 = vsel %vm76, %v71, 0
    %v84 = vsel %vm76, %v72, 0
    %v87 = vsel %vm76, %v73, 0
    %v90 = vsel %vm76, %v74, 0
    %v93 = vsel %vm76, %v75, 0
    %95 = vmatpush.msra.mxu0 0.0
    %96 = vmatpush.msra.mxu0 0.0
    %97 = vmatpush.msra.mxu0 0.0
    %98 = vmatpush.msra.mxu0 0.0
    %99 = vmatpush.msra.mxu0 0.0
    %100 = vmatpush.msra.mxu0 0.0
    %101 = vmatpush.msra.mxu0 0.0
    %102 = vmatpush.msra.mxu0 0.0
    %103 = vmatpush.msra.mxu0 0.0
    %104 = vmatpush.msra.mxu0 0.0
    %105 = vmatpush.msra.mxu0 0.0
    %106 = vmatpush.msra.mxu0 0.0
    %107 = vmatpush.msra.mxu0 0.0
    %108 = vmatpush.msra.mxu0 0.0
    %109 = vmatpush.msra.mxu0 %v25
    %110 = vmatpush.msra.mxu0 %v24
    %111 = vmatmul.f32.gmra.mxu0 %v78
    %v112 = vpop.f32.mrf.mxu0
    %v113 = vadd.f32 0.0, %v112
    %114 = vmatmul.f32.gmra.mxu0 %v81
    %v115 = vpop.f32.mrf.mxu0
    %v116 = vadd.f32 0.0, %v115
    %117 = vmatmul.f32.gmra.mxu0 %v84
    %v118 = vpop.f32.mrf.mxu0
    %v119 = vadd.f32 0.0, %v118
    %120 = vmatmul.f32.gmra.mxu0 %v87
    %v121 = vpop.f32.mrf.mxu0
    %v122 = vadd.f32 0.0, %v121
    %123 = vmatmul.f32.gmra.mxu0 %v90
    %v124 = vpop.f32.mrf.mxu0
    %v125 = vadd.f32 0.0, %v124
    %126 = vmatmul.f32.gmra.mxu0 %v93
    %v127 = vpop.f32.mrf.mxu0
    %v128 = vadd.f32 0.0, %v127
    %129 = vdwg.mxu0
    %v130 = vperm.slane %v69, 0
    %v131 = vmul.f32 %v130, %v113
    %v132 = vmul.f32 %v130, %v116
    %v133 = vmul.f32 %v130, %v119
    %v134 = vperm.slane %v69, 1
    %v135 = vmul.f32 %v134, %v122
    %v136 = vmul.f32 %v134, %v125
    %v137 = vmul.f32 %v134, %v128
    %vm138 = vcmask 261120
    %v140 = vsel %vm138, %v135, 0
    %v143 = vsel %vm138, %v136, 0
    %v146 = vsel %vm138, %v137, 0
    %148 = vmatpush.msra.mxu0 0.0
    %149 = vmatpush.msra.mxu0 0.0
    %150 = vmatpush.msra.mxu0 0.0
    %151 = vmatpush.msra.mxu0 0.0
    %152 = vmatpush.msra.mxu0 0.0
    %153 = vmatpush.msra.mxu0 0.0
    %154 = vmatpush.msra.mxu0 0.0
    %155 = vmatpush.msra.mxu0 0.0
    %156 = vmatpush.msra.mxu0 0.0
    %157 = vmatpush.msra.mxu0 0.0
    %158 = vmatpush.msra.mxu0 0.0
    %159 = vmatpush.msra.mxu0 0.0
    %160 = vmatpush.msra.mxu0 %v41
    %161 = vmatpush.msra.mxu0 %v40
    %162 = vmatpush.msra.mxu0 %v39
    %163 = vmatpush.msra.mxu0 %v38
    %164 = vmatmul.f32.gmra.mxu0 %v140
    %v165 = vpop.f32.mrf.mxu0
    %v166 = vadd.f32 0.0, %v165
    %167 = vmatmul.f32.gmra.mxu0 %v143
    %v168 = vpop.f32.mrf.mxu0
    %v169 = vadd.f32 0.0, %v168
    %170 = vmatmul.f32.gmra.mxu0 %v146
    %v171 = vpop.f32.mrf.mxu0
    %v172 = vadd.f32 0.0, %v171
    %173 = vdwg.mxu0
    %v175 = vsel %vm138, %v131, 0
    %v178 = vsel %vm138, %v132, 0
    %v181 = vsel %vm138, %v133, 0
    %183 = vmatpush.msra.mxu0 0.0
    %184 = vmatpush.msra.mxu0 0.0
    %185 = vmatpush.msra.mxu0 0.0
    %186 = vmatpush.msra.mxu0 0.0
    %187 = vmatpush.msra.mxu0 0.0
    %188 = vmatpush.msra.mxu0 0.0
    %189 = vmatpush.msra.mxu0 0.0
    %190 = vmatpush.msra.mxu0 0.0
    %191 = vmatpush.msra.mxu0 0.0
    %192 = vmatpush.msra.mxu0 0.0
    %193 = vmatpush.msra.mxu0 0.0
    %194 = vmatpush.msra.mxu0 0.0
    %195 = vmatpush.msra.mxu0 %v37
    %196 = vmatpush.msra.mxu0 %v36
    %197 = vmatpush.msra.mxu0 %v35
    %198 = vmatpush.msra.mxu0 %v34
    %199 = vmatmul.f32.gmra.mxu0 %v175
    %v200 = vpop.f32.mrf.mxu0
    %v201 = vadd.f32 %v166, %v200
    %202 = vmatmul.f32.gmra.mxu0 %v178
    %v203 = vpop.f32.mrf.mxu0
    %v204 = vadd.f32 %v169, %v203
    %205 = vmatmul.f32.gmra.mxu0 %v181
    %v206 = vpop.f32.mrf.mxu0
    %v207 = vadd.f32 %v172, %v206
    %208 = vdwg.mxu0
    %v209 = vld [vmem:[%s2] sm:$0xff]
    %v210 = vld [vmem:[%s2 + $0x8] sm:$0xff]
    %v211 = vld [vmem:[%s2 + $0x10] sm:$0xff]
    %vm212 = vcmp.ne.f32.partialorder %v209, 0.0
    %vm213 = vcmp.ne.f32.partialorder %v210, 0.0
    %vm214 = vcmp.ne.f32.partialorder %v211, 0.0
    %v215 = vsel %vm212, -inf, %v201
    %v216 = vsel %vm213, -inf, %v204
    %v217 = vsel %vm214, -inf, %v207
    %vm218 = vcmask 64512
    %v219 = vsel %vm218, %v215, -inf
    %v220 = vsel %vm218, %v216, -inf
    %v221 = vsel %vm218, %v217, -inf
    %v222 = vmax.f32 %v219, %v220
    %v223 = vmax.f32 %v222, %v221
    %v224 = vrot.slane %v223, 4
    %v225 = vmax.f32 %v223, %v224
    %v226 = vrot.slane %v225, 2
    %v227 = vmax.f32 %v225, %v226
    %v228 = vrot.slane %v227, 1
    %v229 = vmax.f32 %v227, %v228
    %v230 = vsub.f32 %v215, %v229
    %v231 = vsub.f32 %v216, %v229
    %v232 = vsub.f32 %v217, %v229
    %v233 = vmul.f32 %v230, 1.442695
    %v234 = vpow.pop %v233
    %v235 = vmul.f32 %v231, 1.442695
    %v236 = vpow.pop %v235
    %v237 = vmul.f32 %v232, 1.442695
    %v238 = vpow.pop %v237
    %v239 = vsel %vm218, %v234, 0.0
    %v240 = vsel %vm218, %v236, 0.0
    %v241 = vadd.f32 %v239, %v240
    %v242 = vsel %vm218, %v238, 0.0
    %v243 = vadd.f32 %v241, %v242
    %v244 = vrot.slane %v243, 4
    %v245 = vadd.f32 %v243, %v244
    %v246 = vrot.slane %v245, 2
    %v247 = vadd.f32 %v245, %v246
    %v248 = vrot.slane %v247, 1
    %v249 = vadd.f32 %v247, %v248
    %v250 = vrcp.pop %v249
    %v251 = vmul.f32 %v249, %v250
    %v252 = vsub.f32 1.0, %v251
    %v253 = vmul.f32 %v250, %v252
    %v254 = vadd.f32 %v250, %v253
    %vm255 = vweird.f32 %v249
    %vm256 = vweird.f32 %v250
    %vm257 = vmor %vm255, %vm256
    %v258 = vsel %vm257, %v250, %v254
    %v259 = vand.u32 2147483647, %v249
    %vm260 = vcmp.eq.f32.partialorder %v259, 8.507059e+37
    %v261 = vand.u32 %v249, 2147483648
    %v262 = vor.u32 1.1754944e-38, %v261
    %v263 = vsel %vm260, %v262, %v258
    %v264 = vmul.f32 %v234, %v263
    %v265 = vmul.f32 %v236, %v263
    %v266 = vmul.f32 %v238, %v263
    %v268 = vsel %vm218, %v264, 0
    %v271 = vsel %vm218, %v265, 0
    %v274 = vsel %vm218, %v266, 0
    %276 = vmatpush.msra.mxu0 0.0
    %277 = vmatpush.msra.mxu0 0.0
    %278 = vmatpush.msra.mxu0 0.0
    %279 = vmatpush.msra.mxu0 0.0
    %280 = vmatpush.msra.mxu0 0.0
    %281 = vmatpush.msra.mxu0 0.0
    %282 = vmatpush.msra.mxu0 0.0
    %283 = vmatpush.msra.mxu0 0.0
    %284 = vmatpush.msra.mxu0 0.0
    %285 = vmatpush.msra.mxu0 0.0
    %286 = vmatpush.msra.mxu0 0.0
    %287 = vmatpush.msra.mxu0 0.0
    %288 = vmatpush.msra.mxu0 0.0
    %289 = vmatpush.msra.mxu0 0.0
    %290 = vmatpush.msra.mxu0 0.0
    %291 = vmatpush.msra.mxu0 %v42
    %292 = vmatmul.f32.gmra.mxu0 %v268
    %v293 = vpop.f32.mrf.mxu0
    %v294 = vadd.f32 0.0, %v293
    %295 = vmatmul.f32.gmra.mxu0 %v271
    %v296 = vpop.f32.mrf.mxu0
    %v297 = vadd.f32 0.0, %v296
    %298 = vmatmul.f32.gmra.mxu0 %v274
    %v299 = vpop.f32.mrf.mxu0
    %v300 = vadd.f32 0.0, %v299
    %301 = vdwg.mxu0
    %v302 = vmul.f32 %v294, %v113
    %v303 = vmul.f32 %v297, %v116
    %v304 = vmul.f32 %v300, %v119
    %vm305 = vcmask 523264
    %v306 = vsel %vm305, %v302, 0.0
    %v307 = vsel %vm305, %v303, 0.0
    %v308 = vadd.f32 %v306, %v307
    %v309 = vsel %vm305, %v304, 0.0
    %v310 = vadd.f32 %v308, %v309
    %v311 = vrot.slane %v310, 4
    %v312 = vadd.f32 %v310, %v311
    %v313 = vrot.slane %v312, 2
    %v314 = vadd.f32 %v312, %v313
    %v315 = vrot.slane %v314, 1
    %v316 = vadd.f32 %v314, %v315
    %317 = vmatpush.msra.mxu0 0.0
    %318 = vmatpush.msra.mxu0 0.0
    %319 = vmatpush.msra.mxu0 0.0
    %320 = vmatpush.msra.mxu0 0.0
    %321 = vmatpush.msra.mxu0 0.0
    %322 = vmatpush.msra.mxu0 0.0
    %323 = vmatpush.msra.mxu0 0.0
    %324 = vmatpush.msra.mxu0 0.0
    %325 = vmatpush.msra.mxu0 0.0
    %326 = vmatpush.msra.mxu0 0.0
    %327 = vmatpush.msra.mxu0 0.0
    %328 = vmatpush.msra.mxu0 0.0
    %329 = vmatpush.msra.mxu0 0.0
    %330 = vmatpush.msra.mxu0 0.0
    %331 = vmatpush.msra.mxu0 0.0
    %332 = vmatpush.msra.mxu0 %v43
    %333 = vmatmul.f32.gmra.mxu0 %v268
    %v334 = vpop.f32.mrf.mxu0
    %v335 = vadd.f32 0.0, %v334
    %336 = vmatmul.f32.gmra.mxu0 %v271
    %v337 = vpop.f32.mrf.mxu0
    %v338 = vadd.f32 0.0, %v337
    %339 = vmatmul.f32.gmra.mxu0 %v274
    %v340 = vpop.f32.mrf.mxu0
    %v341 = vadd.f32 0.0, %v340
    %342 = vdwg.mxu0
    %v343 = vmul.f32 %v335, %v122
    %v344 = vmul.f32 %v338, %v125
    %v345 = vmul.f32 %v341, %v128
    %v346 = vsel %vm305, %v343, 0.0
    %v347 = vsel %vm305, %v344, 0.0
    %v348 = vadd.f32 %v346, %v347
    %v349 = vsel %vm305, %v345, 0.0
    %v350 = vadd.f32 %v348, %v349
    %v351 = vrot.slane %v350, 4
    %v352 = vadd.f32 %v350, %v351
    %v353 = vrot.slane %v352, 2
    %v354 = vadd.f32 %v352, %v353
    %v355 = vrot.slane %v354, 1
    %v356 = vadd.f32 %v354, %v355
    %vm357 = vcmask 1040384
    %v358 = vsel %vm357, %v316, %v356
    %v360 = vsel %vm305, %v358, 0
    %362 = vmatpush.msra.mxu0 0.0
    %363 = vmatpush.msra.mxu0 0.0
    %364 = vmatpush.msra.mxu0 0.0
    %365 = vmatpush.msra.mxu0 0.0
    %366 = vmatpush.msra.mxu0 0.0
    %367 = vmatpush.msra.mxu0 0.0
    %368 = vmatpush.msra.mxu0 0.0
    %369 = vmatpush.msra.mxu0 0.0
    %370 = vmatpush.msra.mxu0 %v33
    %371 = vmatpush.msra.mxu0 %v32
    %372 = vmatpush.msra.mxu0 %v31
    %373 = vmatpush.msra.mxu0 %v30
    %374 = vmatpush.msra.mxu0 %v29
    %375 = vmatpush.msra.mxu0 %v28
    %376 = vmatpush.msra.mxu0 %v27
    %377 = vmatpush.msra.mxu0 %v26
    %378 = vmatmul.f32.gmra.mxu0 %v360
    %v379 = vpop.f32.mrf.mxu0
    %v380 = vadd.f32 0.0, %v379
    %381 = vdwg.mxu0
    %vm382 = vcmask 254976
    %383 = vst.msk [vmem:[#allocation2] sm:$0x3] %vm382, %v380
    // Predicated region
    $region18: #{tpu_custom_call.1} parent=1 // pred_check
      _
    $region19: #{tpu_custom_call.1} parent=1 // pred_check_branch
      %385 = sbr.rel (0) target = $region21
    $region20: #{tpu_custom_call.1} parent=1 // pred_region
      %387 = vsyncadd [#allocation3], 0
      %s389 = sshll.u32 [#allocation2], 4
      %s390 = int_to_ptr.vmem [resolvable:$true] %s389
      %s391 = sshll.u32 %s4, 4
      %s392 = int_to_ptr.hbm [resolvable:$true] %s391
      %394 = dma.vmem_to_hbm [thread:$0]  %s390, 32, %s392, [#allocation3]
    $region21: #{tpu_custom_call.1} parent=1 // pred_fallthru
      _
    // Predicated region
    $region22: #{tpu_custom_call.1} parent=1 // pred_check
      _
    $region23: #{tpu_custom_call.1} parent=1 // pred_check_branch
      %396 = sbr.rel (0) target = $region25
    $region24: #{tpu_custom_call.1} parent=1 // pred_region
      %398 = dma.done [#allocation3], 32
    $region25: #{tpu_custom_call.1} parent=1 // pred_fallthru
      _
    %399 = vsyncpa [#allocation3], 1

</llo_original>
